<compile_context>
chip_gen: v5e
topology: v5e:2x2
jax: 0.10.0
libtpu: 0.0.40
codegen_flags: <defaults>
</compile_context>

<pallas_src>
import jax
import jax.numpy as jnp
from jax.experimental import pallas as pl
from jax.experimental.pallas import tpu as pltpu


def _round_up(v, m):
    return -(-v // m) * m


def _select_tiles(B, T, H, x_itemsize, x_block_budget=4 * 1024 * 1024):
    """Pick (b_tile, t_tile) so one x block is <= ~x_block_budget bytes."""
    step_bytes = H * x_itemsize                      # bytes per (batch row, time step)

    # Time tile: as many steps per grid iteration as the budget allows even with the
    # minimum 8-row batch tile; cap at 256 (the tiling curve is flat past ~512 elems).
    t_cap = (x_block_budget // (8 * step_bytes)) // 8 * 8
    t_cap = max(8, min(256, t_cap))
    if T <= t_cap:
        t_tile = T                                   # full dim: no (8,128) constraint
    else:
        t_tile = t_cap                               # multiple of 8; T zero-padded
    t_padded = T if t_tile == T else _round_up(T, t_tile)

    # Batch tile: multiple of 8, fits the budget, and <= half the padded batch when
    # possible so the "parallel" axis has >= 2 iterations (v7x megacore sharding).
    b_pad8 = _round_up(B, 8)
    b_cap = max(8, (x_block_budget // (t_tile * step_bytes)) // 8 * 8)
    if b_pad8 >= 16:
        b_cap = min(b_cap, max(8, (b_pad8 // 2) // 8 * 8))
    b_tile = min(b_cap, b_pad8)
    b_padded = _round_up(b_pad8, b_tile)
    return b_tile, t_tile, b_padded, t_padded


def _chia_fused_kernel(x_ref, wt_ref, b_ref, o_ref, acc_ref):
    """Streams x, accumulates sum_t(x) in f32; epilogue: one MXU matmul + bias.

    x_ref : (b_tile, t_tile, H)   time-chunk of the input
    wt_ref: (H, H_out)            W^T * (1/T)  (constant block -> resident)
    b_ref : (1, H_out)            bias, f32    (resident)
    o_ref : (b_tile, H_out)       output block (resident across the ti axis)
    acc_ref:(b_tile, H)           f32 running sum of x over time
    """
    ti = pl.program_id(1)

    @pl.when(ti == 0)
    def _():
        acc_ref[...] = jnp.zeros_like(acc_ref)

    # Hot loop: pure VPU/XLU time reduction; the widening cast is fused into the sum
    # instead of materializing an f32 copy of the whole block.
    # TODO(synk): if a bundle dump on v7x bf16 shows the sublane-direction reduce
    # (XLU) saturating, keep a (b_tile, 8, H) accumulator here and do the final 8-way
    # sublane reduce in the ti==last epilogue instead.
    acc_ref[...] += jnp.sum(x_ref[...], axis=1, dtype=jnp.float32)

    @pl.when(ti == pl.num_programs(1) - 1)
    def _():
        # 1/T is folded into wt, so this is mean_t(x) @ W^T; single MXU matmul.
        out = jnp.dot(acc_ref[...].astype(wt_ref.dtype), wt_ref[...],
                      preferred_element_type=jnp.float32)
        o_ref[...] = (out + b_ref[...]).astype(o_ref.dtype)


def _chia_sum_kernel(x_ref, o_ref):
    """Streams x and accumulates the f32 time-sum directly into the resident output."""
    ti = pl.program_id(1)

    @pl.when(ti == 0)
    def _():
        o_ref[...] = jnp.zeros_like(o_ref)

    o_ref[...] += jnp.sum(x_ref[...], axis=1, dtype=jnp.float32)


def chia_block_linear(x, weight, bias, *, compute_dtype=jnp.bfloat16,
                      force_external_matmul=False):
    """ChiaBlock(nn.Linear(H, H_out)).forward for x of shape (B, T, H) -> (B, H_out).

    compute_dtype controls the streaming / matmul dtype (bf16 halves HBM bytes for
    this memory-bound kernel; accumulation and bias add stay f32). Pass
    compute_dtype=None for an exact f32 path (x is otherwise rounded to bf16 before
    the time reduction).
    """
    B, T, H = x.shape
    H_out = weight.shape[0]
    out_dtype = x.dtype
    inv_t = 1.0 / float(T)

    if compute_dtype is not None:
        x = x.astype(compute_dtype)
    x_itemsize = jnp.dtype(x.dtype).itemsize

    b_tile, t_tile, b_padded, t_padded = _select_tiles(B, T, H, x_itemsize)

    # Zero padding is safe: padded time rows add 0 to the sum (we divide by the
    # original T via the folded weight), padded batch rows are sliced off.
    if b_padded != B or t_padded != T:
        x = jnp.pad(x, ((0, b_padded - B), (0, t_padded - T), (0, 0)))
    num_b = b_padded // b_tile
    num_t = t_padded // t_tile

    # 1/T folded into the transposed weight (scale in f32, then optional bf16 cast).
    w_t = jnp.transpose(weight, (1, 0)).astype(jnp.float32) * inv_t       # (H, H_out)
    if compute_dtype is not None:
        w_t = w_t.astype(compute_dtype)
    w_itemsize = jnp.dtype(w_t.dtype).itemsize
    b_2d = bias.astype(jnp.float32).reshape(1, H_out)

    # Pallas double-buffers even constant-index blocks, so a resident weight costs
    # 2 * H * H_out * itemsize of VMEM. Only fuse the epilogue matmul when that is
    # small; otherwise return the time-sum and let XLA do the (tiny-FLOP) matmul.
    fuse_matmul = (not force_external_matmul) and \
                  (2 * H * H_out * w_itemsize <= 8 * 1024 * 1024)

    if fuse_matmul:
        est = (2 * b_tile * t_tile * H * x_itemsize            # double-buffered x
               + 2 * H * H_out * w_itemsize                    # resident weight (x2)
               + 2 * H_out * 4                                 # bias
               + 2 * b_tile * H_out * jnp.dtype(out_dtype).itemsize
               + b_tile * H * 4)                               # accumulator
    else:
        est = (2 * b_tile * t_tile * H * x_itemsize
               + 2 * b_tile * H * 4)

    # Headroom, capped at 48 MiB (v7x: 64 MiB physical per TC), never below the need.
    vmem_limit = min(max(int(est * 1.5), 16 * 1024 * 1024), 48 * 1024 * 1024)
    vmem_limit = max(vmem_limit, int(est) + (1 << 20))

    cparams = pltpu.CompilerParams(
        # batch axis is independent (megacore-shardable); T axis is the reduction
        # (stays "arbitrary": output block / accumulator are resident across it).
        dimension_semantics=("parallel", "arbitrary"),
        vmem_limit_bytes=int(vmem_limit),
    )

    # TODO(synk): add pipeline_mode=pl.Buffered(3) on the x BlockSpec only if an
    # xprof trace shows DMA gaps at batch-block boundaries (gate on the trace).
    x_spec = pl.BlockSpec((b_tile, t_tile, H), lambda bi, ti: (bi, ti, 0))

    if fuse_matmul:
        grid_spec = pltpu.PrefetchScalarGridSpec(
            num_scalar_prefetch=0,
            grid=(num_b, num_t),
            in_specs=[
                x_spec,
                pl.BlockSpec((H, H_out), lambda bi, ti: (0, 0)),   # resident weight
                pl.BlockSpec((1, H_out), lambda bi, ti: (0, 0)),   # resident bias
            ],
            out_specs=pl.BlockSpec((b_tile, H_out), lambda bi, ti: (bi, 0)),
            scratch_shapes=[pltpu.VMEM((b_tile, H), jnp.float32)],
        )
        out = pl.pallas_call(
            _chia_fused_kernel,
            out_shape=jax.ShapeDtypeStruct((b_padded, H_out), out_dtype),
            grid_spec=grid_spec,
            compiler_params=cparams,
        )(x, w_t, b_2d)
        return out[:B]

    # Large-weight path: kernel streams x and returns the f32 time-sum; the single
    # matmul (negligible FLOPs, weight never enters VMEM as a resident block) runs
    # in XLA.  w_t already carries the 1/T factor.
    grid_spec = pltpu.PrefetchScalarGridSpec(
        num_scalar_prefetch=0,
        grid=(num_b, num_t),
        in_specs=[x_spec],
        out_specs=pl.BlockSpec((b_tile, H), lambda bi, ti: (bi, 0)),
    )
    x_sum = pl.pallas_call(
        _chia_sum_kernel,
        out_shape=jax.ShapeDtypeStruct((b_padded, H), jnp.float32),
        grid_spec=grid_spec,
        compiler_params=cparams,
    )(x)[:B]
    out = jnp.dot(x_sum.astype(w_t.dtype), w_t,
                  preferred_element_type=jnp.float32) + b_2d
    return out.astype(out_dtype)


if __name__ == "__main__":
    key = jax.random.PRNGKey(0)
    kx, kw, kb = jax.random.split(key, 3)

    B, T, H, H_out = 2, 8, 32, 32

    x = jax.random.normal(kx, (B, T, H), dtype=jnp.float32)
    # deterministic "nn.Linear(H, H_out)"-shaped parameters
    weight = jax.random.normal(kw, (H_out, H), dtype=jnp.float32) * (1.0 / jnp.sqrt(H))
    bias = jax.random.normal(kb, (H_out,), dtype=jnp.float32) * 0.1

    # pure-JAX reference of ChiaBlock(nn.Linear).forward:
    #   stack([linear(x[:, t]) for t], -1).mean(-1)
    per_t = jnp.einsum("bth,oh->bto", x, weight) + bias     # (B, T, H_out)
    ref = jnp.mean(per_t, axis=1)                           # (B, H_out)

    # 1) exact f32 path (fused epilogue matmul), tight tolerance
    out_f32 = jax.block_until_ready(chia_block_linear(x, weight, bias, compute_dtype=None))
    assert out_f32.shape == (B, H_out)
    assert jnp.allclose(out_f32, ref, atol=1e-4, rtol=1e-4), (
        "f32 path max abs err", float(jnp.max(jnp.abs(out_f32 - ref))))

    # 2) default bf16 streaming path (x rounded to bf16 before the time reduction)
    out_bf16 = jax.block_until_ready(chia_block_linear(x, weight, bias))
    assert out_bf16.shape == (B, H_out)
    assert jnp.allclose(out_bf16.astype(jnp.float32), ref, atol=5e-2, rtol=5e-2), (
        "bf16 path max abs err", float(jnp.max(jnp.abs(out_bf16.astype(jnp.float32) - ref))))

    # 3) large-weight code path (external matmul), forced at small shapes for coverage
    out_ext = jax.block_until_ready(
        chia_block_linear(x, weight, bias, compute_dtype=None, force_external_matmul=True))
    assert jnp.allclose(out_ext, ref, atol=1e-4, rtol=1e-4), (
        "external-matmul path max abs err", float(jnp.max(jnp.abs(out_ext - ref))))

    print("KERNEL_OK")
</pallas_src>

<mosaic_0001>
module attributes {stable_mosaic.version = 11 : i64} {
  func.func @_chia_fused_kernel(%arg0: i32, %arg1: i32, %arg2: memref<8x8x32xf32, #tpu.memory_space<vmem>>, %arg3: memref<32x32xf32, #tpu.memory_space<vmem>>, %arg4: memref<1x32xf32, #tpu.memory_space<vmem>>, %arg5: memref<8x32xf32, #tpu.memory_space<vmem>>, %arg6: memref<8x32xf32, #tpu.memory_space<vmem>>) attributes {dimension_semantics = [#tpu.dimension_semantics<parallel>, #tpu.dimension_semantics<arbitrary>], iteration_bounds = array<i64: 1, 1>, scalar_prefetch = 0 : i64, scratch_operands = 1 : i64, tpu.core_type = #tpu.core_type<tc>, window_params = [{transform_indices = @transform_0, window_bounds = array<i64: 8, 8, 32>}, {pipeline_mode = #tpu.pipeline_mode<synchronous>, transform_indices = @transform_1, window_bounds = array<i64: 32, 32>}, {pipeline_mode = #tpu.pipeline_mode<synchronous>, transform_indices = @transform_2, window_bounds = array<i64: 1, 32>}, {transform_indices = @transform_3, window_bounds = array<i64: 8, 32>}]} {
    %c0_i32 = arith.constant 0 : i32
    %0 = arith.cmpi eq, %arg1, %c0_i32 : i32
    %1 = arith.extui %0 : i1 to i32
    %c0_i32_0 = arith.constant 0 : i32
    %2 = arith.cmpi ne, %1, %c0_i32_0 : i32
    scf.if %2 {
      %cst_9 = arith.constant 0.000000e+00 : f32
      %11 = vector.broadcast %cst_9 : f32 to vector<8x32xf32>
      %c0_10 = arith.constant 0 : index
      %c0_11 = arith.constant 0 : index
      %12 = vector.load %arg6[%c0_10, %c0_11] : memref<8x32xf32, #tpu.memory_space<vmem>>, vector<8x32xf32>
      tpu.vector_store %arg6[%c0_10, %c0_11], %11 {strides = array<i32>} : memref<8x32xf32, #tpu.memory_space<vmem>>, vector<8x32xf32>,
    } else {
    }
    %c0 = arith.constant 0 : index
    %c0_1 = arith.constant 0 : index
    %3 = vector.load %arg6[%c0, %c0_1] : memref<8x32xf32, #tpu.memory_space<vmem>>, vector<8x32xf32>
    %c0_2 = arith.constant 0 : index
    %c0_3 = arith.constant 0 : index
    %c0_4 = arith.constant 0 : index
    %4 = vector.load %arg2[%c0_2, %c0_3, %c0_4] : memref<8x8x32xf32, #tpu.memory_space<vmem>>, vector<8x8x32xf32>
    %cst = arith.constant dense<0.000000e+00> : vector<8x32xf32>
    %5 = vector.multi_reduction <add>, %4, %cst [1] : vector<8x8x32xf32> to vector<8x32xf32>
    %6 = arith.addf %3, %5 : vector<8x32xf32>
    %c0_5 = arith.constant 0 : index
    %c0_6 = arith.constant 0 : index
    %7 = vector.load %arg6[%c0_5, %c0_6] : memref<8x32xf32, #tpu.memory_space<vmem>>, vector<8x32xf32>
    tpu.vector_store %arg6[%c0_5, %c0_6], %6 {strides = array<i32>} : memref<8x32xf32, #tpu.memory_space<vmem>>, vector<8x32xf32>,
    %c0_i32_7 = arith.constant 0 : i32
    %8 = arith.cmpi eq, %arg1, %c0_i32_7 : i32
    %9 = arith.extui %8 : i1 to i32
    %c0_i32_8 = arith.constant 0 : i32
    %10 = arith.cmpi ne, %9, %c0_i32_8 : i32
    scf.if %10 {
      %c0_9 = arith.constant 0 : index
      %c0_10 = arith.constant 0 : index
      %11 = vector.load %arg6[%c0_9, %c0_10] : memref<8x32xf32, #tpu.memory_space<vmem>>, vector<8x32xf32>
      %c0_11 = arith.constant 0 : index
      %c0_12 = arith.constant 0 : index
      %12 = vector.load %arg3[%c0_11, %c0_12] : memref<32x32xf32, #tpu.memory_space<vmem>>, vector<32x32xf32>
      %cst_13 = arith.constant dense<0.000000e+00> : vector<8x32xf32>
      %13 = tpu.matmul %11, %12, %cst_13 {dimension_numbers = #tpu.dot_dimension_numbers<[1], [0], [0], [1], [0, 0, 1, 1], [], []>} : vector<8x32xf32>, vector<32x32xf32>, vector<8x32xf32> -> vector<8x32xf32>
      %c0_14 = arith.constant 0 : index
      %c0_15 = arith.constant 0 : index
      %14 = vector.load %arg4[%c0_14, %c0_15] : memref<1x32xf32, #tpu.memory_space<vmem>>, vector<1x32xf32>
      %15 = vector.broadcast %14 : vector<1x32xf32> to vector<8x32xf32>
      %16 = arith.addf %13, %15 : vector<8x32xf32>
      %c0_16 = arith.constant 0 : index
      %c0_17 = arith.constant 0 : index
      %17 = vector.load %arg5[%c0_16, %c0_17] : memref<8x32xf32, #tpu.memory_space<vmem>>, vector<8x32xf32>
      tpu.vector_store %arg5[%c0_16, %c0_17], %16 {strides = array<i32>} : memref<8x32xf32, #tpu.memory_space<vmem>>, vector<8x32xf32>,
    } else {
    }
    return
  }
  func.func @transform_0(%arg0: i32, %arg1: i32) -> (i32, i32, i32) {
    %c0_i32 = arith.constant 0 : i32
    %c0_i32_0 = arith.constant 0 : i32
    return %arg0, %arg1, %c0_i32 : i32, i32, i32
  }
  func.func @transform_1(%arg0: i32, %arg1: i32) -> (i32, i32) {
    %c0_i32 = arith.constant 0 : i32
    %c0_i32_0 = arith.constant 0 : i32
    %c0_i32_1 = arith.constant 0 : i32
    return %c0_i32, %c0_i32_0 : i32, i32
  }
  func.func @transform_2(%arg0: i32, %arg1: i32) -> (i32, i32) {
    %c0_i32 = arith.constant 0 : i32
    %c0_i32_0 = arith.constant 0 : i32
    %c0_i32_1 = arith.constant 0 : i32
    return %c0_i32, %c0_i32_0 : i32, i32
  }
  func.func @transform_3(%arg0: i32, %arg1: i32) -> (i32, i32) {
    %c0_i32 = arith.constant 0 : i32
    %c0_i32_0 = arith.constant 0 : i32
    return %arg0, %c0_i32 : i32, i32
  }
}

</mosaic_0001>

<llo_original>
// kernel: tpu_custom_call.1
$region0: #{tpu_custom_call.1}
  #allocation0 [shape = 'u32[]', space=smem, size = 0x4, offset = 0x4, fixed_abs, tag = 'smem constant byte address 0x4 - core index']
  #allocation1 [shape = 'u32[72,128]{1,0:T(1,128)}', space=vmem, size = 0x9000, scoped, tag = 'internal scratch']
  #allocation2 [shape = 'f32[8,32]{1,0:T(8,128)}', space=vmem, size = 0x1000, scoped, tag = 'scratch operand']
  %s0 = inlined_call_operand.hbm [shape: f32[8,8,32], index: 0, kind: input, shape index: {}]
  %s1 = inlined_call_operand.hbm [shape: f32[32,32], index: 1, kind: input, shape index: {}]
  %s2 = inlined_call_operand.vmem [shape: f32[1,32], index: 2, kind: input, shape index: {}]
  %s3 = inlined_call_operand.hbm [shape: f32[8,32], index: 3, kind: output, shape index: {}]
  %s4 = sld [smem:[#allocation0]]
  $region38: #{tpu_custom_call.1} parent=0
    _
  %s6 = ssub.s32 1, %s4
  %s7 = scalar_select 0, %s6, %s4
  $region1: #{tpu_custom_call.1} parent=0
    #allocation3 [shape = 'u8[32768]{0}', space=vmem, size = 0x8000, scoped, tag = 'input window, operand 0, single buffered']
    #allocation4 [shape = 's32[1]{0}', space=sflag, size = 0x4, scoped, tag = 'scoped memory for tpu_custom_call.1']
    #allocation5 [shape = 's32[1]{0}', space=sflag, size = 0x4, scoped, tag = 'scoped memory for tpu_custom_call.1']
    #allocation6 [shape = 'u8[16384]{0}', space=vmem, size = 0x4000, scoped, tag = 'input window, operand 1, single buffered']
    #allocation7 [shape = 's32[1]{0}', space=sflag, size = 0x4, scoped, tag = 'scoped memory for tpu_custom_call.1']
    #allocation8 [shape = 'u8[4096]{0}', space=vmem, size = 0x1000, scoped, tag = 'output window, operand 0, single buffered']
    %8 = vsyncpa [#allocation4], 0
    %9 = vsyncpa [#allocation7], 0
    %10 = vsyncpa [#allocation5], 0
    // Predicated region
    $region2: #{tpu_custom_call.1} parent=1 // pred_check
      _
    $region3: #{tpu_custom_call.1} parent=1 // pred_check_branch
      %12 = sbr.rel (0) target = $region5
    $region4: #{tpu_custom_call.1} parent=1 // pred_region
      %14 = vsyncadd [#allocation4], 0
      %s15 = sshll.u32 %s0, 4
      %s16 = int_to_ptr.hbm [resolvable:$true] %s15
      %s17 = sshll.u32 [#allocation3], 4
      %s18 = int_to_ptr.vmem [resolvable:$true] %s17
      %23 = dma.hbm_to_vmem [thread:$0]  %s16, 1024, %s18, [#allocation4], 128, 128, 8
    $region5: #{tpu_custom_call.1} parent=1 // pred_fallthru
      _
    // Predicated region
    $region6: #{tpu_custom_call.1} parent=1 // pred_check
      _
    $region7: #{tpu_custom_call.1} parent=1 // pred_check_branch
      %25 = sbr.rel (0) target = $region9
    $region8: #{tpu_custom_call.1} parent=1 // pred_region
      %27 = vsyncadd [#allocation7], 0
      %s28 = sshll.u32 %s1, 4
      %s29 = int_to_ptr.hbm [resolvable:$true] %s28
      %s30 = sshll.u32 [#allocation6], 4
      %s31 = int_to_ptr.vmem [resolvable:$true] %s30
      %36 = dma.hbm_to_vmem [thread:$0]  %s29, 512, %s31, [#allocation7], 128, 128, 8
    $region9: #{tpu_custom_call.1} parent=1 // pred_fallthru
      _
    // Predicated region
    $region10: #{tpu_custom_call.1} parent=1 // pred_check
      _
    $region11: #{tpu_custom_call.1} parent=1 // pred_check_branch
      %38 = sbr.rel (0) target = $region13
    $region12: #{tpu_custom_call.1} parent=1 // pred_region
      _
    $region13: #{tpu_custom_call.1} parent=1 // pred_fallthru
      _
    // Predicated region
    $region14: #{tpu_custom_call.1} parent=1 // pred_check
      _
    $region15: #{tpu_custom_call.1} parent=1 // pred_check_branch
      %40 = sbr.rel (0) target = $region17
    $region16: #{tpu_custom_call.1} parent=1 // pred_region
      %42 = dma.done [#allocation4], 1024
    $region17: #{tpu_custom_call.1} parent=1 // pred_fallthru
      _
    // Predicated region
    $region18: #{tpu_custom_call.1} parent=1 // pred_check
      _
    $region19: #{tpu_custom_call.1} parent=1 // pred_check_branch
      %44 = sbr.rel (0) target = $region21
    $region20: #{tpu_custom_call.1} parent=1 // pred_region
      %46 = dma.done [#allocation7], 512
    $region21: #{tpu_custom_call.1} parent=1 // pred_fallthru
      _
    %p47 = scmp.eq.s32.totalorder 0, 0
    // Predicated region
    $region22: #{tpu_custom_call.1} parent=1 // pred_check
      %p48 = pneg %p47
    $region23: #{tpu_custom_call.1} parent=1 // pred_check_branch
      %50 = sbr.rel (%p48) target = $region25
    $region24: #{tpu_custom_call.1} parent=1 // pred_region
      %vm51 = vcmask 261120
      %52 = vst.msk [vmem:[#allocation2] sm:$0xff] %vm51, 0.0
    $region25: #{tpu_custom_call.1} parent=1 // pred_fallthru
      _
    %v53 = vld [vmem:[#allocation2] sm:$0xff]
    %v54 = vld [vmem:[#allocation3] sm:$0xff]
    %v55 = vld [vmem:[#allocation3 + $0x8] sm:$0xff]
    %v56 = vld [vmem:[#allocation3 + $0x10] sm:$0xff]
    %v57 = vld [vmem:[#allocation3 + $0x18] sm:$0xff]
    %v58 = vld [vmem:[#allocation3 + $0x20] sm:$0xff]
    %v59 = vld [vmem:[#allocation3 + $0x28] sm:$0xff]
    %v60 = vld [vmem:[#allocation3 + $0x30] sm:$0xff]
    %v61 = vld [vmem:[#allocation3 + $0x38] sm:$0xff]
    %vm62 = vcmask 261120
    %v63 = vsel %vm62, %v54, 0.0
    %v64 = vrot.slane %v63, 4
    %v65 = vadd.f32 %v63, %v64
    %v66 = vrot.slane %v65, 2
    %v67 = vadd.f32 %v65, %v66
    %v68 = vrot.slane %v67, 1
    %v69 = vadd.f32 %v67, %v68
    %v70 = vsel %vm62, %v55, 0.0
    %v71 = vrot.slane %v70, 4
    %v72 = vadd.f32 %v70, %v71
    %v73 = vrot.slane %v72, 2
    %v74 = vadd.f32 %v72, %v73
    %v75 = vrot.slane %v74, 1
    %v76 = vadd.f32 %v74, %v75
    %v77 = vsel %vm62, %v56, 0.0
    %v78 = vrot.slane %v77, 4
    %v79 = vadd.f32 %v77, %v78
    %v80 = vrot.slane %v79, 2
    %v81 = vadd.f32 %v79, %v80
    %v82 = vrot.slane %v81, 1
    %v83 = vadd.f32 %v81, %v82
    %v84 = vsel %vm62, %v57, 0.0
    %v85 = vrot.slane %v84, 4
    %v86 = vadd.f32 %v84, %v85
    %v87 = vrot.slane %v86, 2
    %v88 = vadd.f32 %v86, %v87
    %v89 = vrot.slane %v88, 1
    %v90 = vadd.f32 %v88, %v89
    %v91 = vsel %vm62, %v58, 0.0
    %v92 = vrot.slane %v91, 4
    %v93 = vadd.f32 %v91, %v92
    %v94 = vrot.slane %v93, 2
    %v95 = vadd.f32 %v93, %v94
    %v96 = vrot.slane %v95, 1
    %v97 = vadd.f32 %v95, %v96
    %v98 = vsel %vm62, %v59, 0.0
    %v99 = vrot.slane %v98, 4
    %v100 = vadd.f32 %v98, %v99
    %v101 = vrot.slane %v100, 2
    %v102 = vadd.f32 %v100, %v101
    %v103 = vrot.slane %v102, 1
    %v104 = vadd.f32 %v102, %v103
    %v105 = vsel %vm62, %v60, 0.0
    %v106 = vrot.slane %v105, 4
    %v107 = vadd.f32 %v105, %v106
    %v108 = vrot.slane %v107, 2
    %v109 = vadd.f32 %v107, %v108
    %v110 = vrot.slane %v109, 1
    %v111 = vadd.f32 %v109, %v110
    %v112 = vsel %vm62, %v61, 0.0
    %v113 = vrot.slane %v112, 4
    %v114 = vadd.f32 %v112, %v113
    %v115 = vrot.slane %v114, 2
    %v116 = vadd.f32 %v114, %v115
    %v117 = vrot.slane %v116, 1
    %v118 = vadd.f32 %v116, %v117
    %vm127 = vcmask 1041409
    %v128 = vsel %vm127, %v76, %v69
    %vm129 = vcmask 1042434
    %v130 = vsel %vm129, %v83, %v128
    %vm131 = vcmask 1043459
    %v132 = vsel %vm131, %v90, %v130
    %vm133 = vcmask 1044484
    %v134 = vsel %vm133, %v97, %v132
    %vm135 = vcmask 1045509
    %v136 = vsel %vm135, %v104, %v134
    %vm137 = vcmask 1046534
    %v138 = vsel %vm137, %v111, %v136
    %vm139 = vcmask 1047559
    %v140 = vsel %vm139, %v118, %v138
    %v142 = vadd.f32 %v53, %v140
    %143 = vst.msk [vmem:[#allocation2] sm:$0xff] %vm62, %v142
    // Predicated region
    $region26: #{tpu_custom_call.1} parent=1 // pred_check
      %p144 = pneg %p47
    $region27: #{tpu_custom_call.1} parent=1 // pred_check_branch
      %146 = sbr.rel (%p144) target = $region29
    $region28: #{tpu_custom_call.1} parent=1 // pred_region
      %v147 = vld [vmem:[#allocation2] sm:$0xff]
      %v148 = vld [vmem:[#allocation6] sm:$0xff]
      %v149 = vld [vmem:[#allocation6 + $0x8] sm:$0xff]
      %v150 = vld [vmem:[#allocation6 + $0x10] sm:$0xff]
      %v151 = vld [vmem:[#allocation6 + $0x18] sm:$0xff]
      %v152 = vld [vmem:[%s2] sm:$0x1]
      %v154 = vperm.slane %v152, 0
      %v157 = vsel %vm62, %v147, 0
      %159 = vmatpush.msra.mxu0 0.0
      %160 = vmatpush.msra.mxu0 0.0
      %161 = vmatpush.msra.mxu0 0.0
      %162 = vmatpush.msra.mxu0 0.0
      %163 = vmatpush.msra.mxu0 0.0
      %164 = vmatpush.msra.mxu0 0.0
      %165 = vmatpush.msra.mxu0 0.0
      %166 = vmatpush.msra.mxu0 0.0
      %167 = vmatpush.msra.mxu0 0.0
      %168 = vmatpush.msra.mxu0 0.0
      %169 = vmatpush.msra.mxu0 0.0
      %170 = vmatpush.msra.mxu0 0.0
      %171 = vmatpush.msra.mxu0 %v151
      %172 = vmatpush.msra.mxu0 %v150
      %173 = vmatpush.msra.mxu0 %v149
      %174 = vmatpush.msra.mxu0 %v148
      %175 = vmatmul.f32.gmra.mxu0 %v157
      %v176 = vpop.f32.mrf.mxu0
      %v177 = vadd.f32 %v154, %v176
      %178 = vdwg.mxu0
      %179 = vst.msk [vmem:[#allocation8] sm:$0xff] %vm62, %v177
    $region29: #{tpu_custom_call.1} parent=1 // pred_fallthru
      _
    // Predicated region
    $region30: #{tpu_custom_call.1} parent=1 // pred_check
      _
    $region31: #{tpu_custom_call.1} parent=1 // pred_check_branch
      %181 = sbr.rel (0) target = $region33
    $region32: #{tpu_custom_call.1} parent=1 // pred_region
      %183 = vsyncadd [#allocation5], 0
      %s185 = sshll.u32 [#allocation8], 4
      %s186 = int_to_ptr.vmem [resolvable:$true] %s185
      %s187 = sshll.u32 %s3, 4
      %s188 = int_to_ptr.hbm [resolvable:$true] %s187
      %190 = dma.vmem_to_hbm [thread:$0]  %s186, 128, %s188, [#allocation5]
    $region33: #{tpu_custom_call.1} parent=1 // pred_fallthru
      _
    // Predicated region
    $region34: #{tpu_custom_call.1} parent=1 // pred_check
      _
    $region35: #{tpu_custom_call.1} parent=1 // pred_check_branch
      %192 = sbr.rel (0) target = $region37
    $region36: #{tpu_custom_call.1} parent=1 // pred_region
      %194 = dma.done [#allocation5], 128
    $region37: #{tpu_custom_call.1} parent=1 // pred_fallthru
      _
    %195 = vsyncpa [#allocation4], 1
    %196 = vsyncpa [#allocation7], 1
    %197 = vsyncpa [#allocation5], 1

</llo_original>
